<compile_context>
chip_gen: v5e
topology: v5e:2x2
jax: 0.10.0
libtpu: 0.0.40
codegen_flags: <defaults>
</compile_context>

<pallas_src>
import functools

import jax
import jax.numpy as jnp
from jax import lax
from jax.experimental import pallas as pl
from jax.experimental.pallas import tpu as pltpu

LN_EPS = 1e-5  # nn.LayerNorm default


def _round_up(n, m):
    return (n + m - 1) // m * m


# --------------------------------------------------------------------------- #
# Kernel
# --------------------------------------------------------------------------- #
def _mixer_kernel(x_ref, g_ref, b_ref, w1_ref, b1_ref, w2_ref, b2_ref, o_ref,
                  *, h_chunk):
    x = x_ref[...].astype(jnp.float32)                    # (TR, D)
    d = x.shape[-1]
    hp = w1_ref.shape[1]

    # ---- LayerNorm (f32, biased variance like nn.LayerNorm) ----------------
    inv_d = jnp.float32(1.0 / d)
    mean = jnp.sum(x, axis=-1, keepdims=True) * inv_d
    xc = x - mean
    var = jnp.sum(xc * xc, axis=-1, keepdims=True) * inv_d
    xn = xc * lax.rsqrt(var + LN_EPS) * g_ref[...] + b_ref[...]
    xn_bf = xn.astype(jnp.bfloat16)                       # MXU operand

    # ---- MLP: Linear1 -> ReLU -> Linear2 (bf16 operands, f32 accumulate) ---
    # Static chunking of the hidden dim bounds the live (TR, h_chunk) temp.
    # TODO(synk): switch to lax.fori_loop(..., unroll=True) if chunk count > ~8.
    y = None
    for lo in range(0, hp, h_chunk):
        hi = min(lo + h_chunk, hp)
        h = jnp.dot(xn_bf, w1_ref[:, lo:hi],
                    preferred_element_type=jnp.float32)
        h = jnp.maximum(h + b1_ref[:, lo:hi], 0.0)
        part = jnp.dot(h.astype(jnp.bfloat16), w2_ref[lo:hi, :],
                       preferred_element_type=jnp.float32)
        y = part if y is None else y + part
    y = y + b2_ref[...]

    # ---- residual: re-read x_ref (input buffer is resident in VMEM) --------
    o_ref[...] = (x_ref[...].astype(jnp.float32) + y).astype(o_ref.dtype)


# --------------------------------------------------------------------------- #
# Host-side wrappers
# --------------------------------------------------------------------------- #
def prepare_params(gamma, beta, w1, b1, w2, b2):
    """One-time weight prep (hoisted out of the per-call path): pad the hidden
    dim to a multiple of 128 (exact — padded units carry zero weights/biases)
    and cast the matmul weights to bf16.  w1: (D, H), w2: (H, D), (in, out)."""
    D, H = w1.shape
    Hp = _round_up(H, 128)
    f32 = jnp.float32
    return dict(
        gamma=gamma.astype(f32).reshape(1, D),
        beta=beta.astype(f32).reshape(1, D),
        w1=jnp.pad(w1.astype(f32), ((0, 0), (0, Hp - H))).astype(jnp.bfloat16),
        b1=jnp.pad(b1.astype(f32), (0, Hp - H)).reshape(1, Hp),
        w2=jnp.pad(w2.astype(f32), ((0, Hp - H), (0, 0))).astype(jnp.bfloat16),
        b2=b2.astype(f32).reshape(1, D),
    )


def _vmem_estimate(tr, D, Hp, x_bytes, out_bytes, h_chunk, single_buf_weights):
    wbuf = 1 if single_buf_weights else 2
    return (2 * tr * D * x_bytes                 # x tile (double-buffered)
            + 2 * tr * D * out_bytes             # out tile (double-buffered)
            + wbuf * (2 * D * Hp * 2)            # W1 + W2 (bf16)
            + wbuf * (3 * D + Hp) * 4            # gamma / beta / b1 / b2
            + tr * (2 * D + h_chunk) * 4)        # xn / y / h live f32 temps


def feature_mixer_layer(x, params, *, tile_rows=256, h_chunk_max=512,
                        single_buffer_weights=True,
                        vmem_cap_bytes=48 * 1024 * 1024):
    """x: (..., D) in its native dtype; params: output of prepare_params()."""
    D = x.shape[-1]
    rows = x.size // D
    Hp = params["w1"].shape[1]

    # Row tile: multiple of 8 sublanes; ragged last tile handled by cdiv grid.
    # tile_rows is a per-generation tunable (512+ on v5e/v6e, 256 on v7x).
    tr = min(_round_up(tile_rows, 8), _round_up(rows, 8))
    grid = (pl.cdiv(rows, tr),)

    # Chunk the hidden dim only when it is large.
    h_chunk = Hp if Hp <= 2048 else min(h_chunk_max, Hp)

    x2d = x.reshape(rows, D)          # metadata reshape only; no pad, no cast
    kernel = functools.partial(_mixer_kernel, h_chunk=h_chunk)
    row_map = lambda i: (i, 0)
    const_map = lambda i: (0, 0)

    def _resident_specs(shapes, single_buf):
        # Weights/biases: same full block every grid step -> resident in VMEM.
        # Constant index_map means no prefetch is needed, so single-buffer them.
        if single_buf:
            try:
                return [pl.BlockSpec(s, const_map, pipeline_mode=pl.Buffered(1))
                        for s in shapes]
            except (TypeError, AttributeError):
                pass                   # older jax: no pipeline_mode kwarg
        return [pl.BlockSpec(s, const_map) for s in shapes]

    def _call(single_buf):
        est = _vmem_estimate(tr, D, Hp, x.dtype.itemsize, x.dtype.itemsize,
                             h_chunk, single_buf)
        vmem_limit = int(min(max(2 * est, 32 * 1024 * 1024), vmem_cap_bytes))
        return pl.pallas_call(
            kernel,
            out_shape=jax.ShapeDtypeStruct((rows, D), x.dtype),
            grid=grid,
            in_specs=[pl.BlockSpec((tr, D), row_map)]        # x tile
            + _resident_specs([(1, D),                        # gamma
                               (1, D),                        # beta
                               (D, Hp),                       # W1 (in, out)
                               (1, Hp),                       # b1
                               (Hp, D),                       # W2 (in, out)
                               (1, D)],                       # b2
                              single_buf),
            out_specs=pl.BlockSpec((tr, D), row_map),
            compiler_params=pltpu.CompilerParams(
                dimension_semantics=("parallel",),
                vmem_limit_bytes=vmem_limit),
        )(x2d, params["gamma"], params["beta"], params["w1"], params["b1"],
          params["w2"], params["b2"])

    if single_buffer_weights:
        try:
            out2d = _call(True)
        except Exception:
            # Fallback for jax revisions where Buffered(1) is rejected by the
            # Mosaic grid pipeline; double-buffered weights still run fine.
            out2d = _call(False)
    else:
        out2d = _call(False)

    return out2d.reshape(x.shape)


# --------------------------------------------------------------------------- #
# Init + reference + self-test
# --------------------------------------------------------------------------- #
def init_params(key, in_dim, mlp_ratio=1):
    """trunc_normal(std=0.02) weights, zero biases, LN gamma=1 / beta=0."""
    hid = int(in_dim * mlp_ratio)
    k1, k2 = jax.random.split(key)
    w1_oi = 0.02 * jax.random.truncated_normal(k1, -2.0, 2.0, (hid, in_dim),
                                               jnp.float32)
    w2_oi = 0.02 * jax.random.truncated_normal(k2, -2.0, 2.0, (in_dim, hid),
                                               jnp.float32)
    return dict(
        gamma=jnp.ones((in_dim,), jnp.float32),
        beta=jnp.zeros((in_dim,), jnp.float32),
        w1=w1_oi.T,                      # (in, out)
        b1=jnp.zeros((hid,), jnp.float32),
        w2=w2_oi.T,                      # (in, out)
        b2=jnp.zeros((in_dim,), jnp.float32),
    )


def _reference(x, p):
    """Pure-JAX f32 reference of the PyTorch forward."""
    mean = jnp.mean(x, -1, keepdims=True)
    var = jnp.mean((x - mean) ** 2, -1, keepdims=True)
    xn = (x - mean) / jnp.sqrt(var + LN_EPS) * p["gamma"] + p["beta"]
    h = jnp.maximum(xn @ p["w1"] + p["b1"], 0.0)
    return x + (h @ p["w2"] + p["b2"])


if __name__ == "__main__":
    key = jax.random.PRNGKey(0)
    kx, kp = jax.random.split(key)

    B, S, D = 2, 8, 32          # in_dim = 32, mlp_ratio = 1 -> hidden = 32
    x = jax.random.normal(kx, (B, S, D), jnp.float32)
    raw = init_params(kp, D, mlp_ratio=1)
    prep = prepare_params(raw["gamma"], raw["beta"], raw["w1"], raw["b1"],
                          raw["w2"], raw["b2"])

    out = feature_mixer_layer(x, prep)
    out = jax.block_until_ready(out)

    ref = _reference(x, raw)
    assert out.shape == x.shape and out.dtype == x.dtype
    # bf16 MXU operands -> slightly looser tolerance than pure-f32 reference.
    assert jnp.allclose(out, ref, atol=1e-2, rtol=1e-2), "mismatch vs reference"

    print("KERNEL_OK")
</pallas_src>

<mosaic_0001>
module attributes {stable_mosaic.version = 11 : i64} {
  func.func @_mixer_kernel(%arg0: i32, %arg1: memref<16x32xf32, #tpu.memory_space<vmem>>, %arg2: memref<1x32xf32, #tpu.memory_space<vmem>>, %arg3: memref<1x32xf32, #tpu.memory_space<vmem>>, %arg4: memref<32x128xbf16, #tpu.memory_space<vmem>>, %arg5: memref<1x128xf32, #tpu.memory_space<vmem>>, %arg6: memref<128x32xbf16, #tpu.memory_space<vmem>>, %arg7: memref<1x32xf32, #tpu.memory_space<vmem>>, %arg8: memref<16x32xf32, #tpu.memory_space<vmem>>) attributes {dimension_semantics = [#tpu.dimension_semantics<parallel>], iteration_bounds = array<i64: 1>, scalar_prefetch = 0 : i64, scratch_operands = 0 : i64, tpu.core_type = #tpu.core_type<tc>, window_params = [{transform_indices = @transform_0, window_bounds = array<i64: 16, 32>}, {pipeline_mode = #tpu.pipeline_mode<synchronous>, transform_indices = @transform_1, window_bounds = array<i64: 1, 32>}, {pipeline_mode = #tpu.pipeline_mode<synchronous>, transform_indices = @transform_2, window_bounds = array<i64: 1, 32>}, {pipeline_mode = #tpu.pipeline_mode<synchronous>, transform_indices = @transform_3, window_bounds = array<i64: 32, 128>}, {pipeline_mode = #tpu.pipeline_mode<synchronous>, transform_indices = @transform_4, window_bounds = array<i64: 1, 128>}, {pipeline_mode = #tpu.pipeline_mode<synchronous>, transform_indices = @transform_5, window_bounds = array<i64: 128, 32>}, {pipeline_mode = #tpu.pipeline_mode<synchronous>, transform_indices = @transform_6, window_bounds = array<i64: 1, 32>}, {transform_indices = @transform_7, window_bounds = array<i64: 16, 32>}]} {
    %c0 = arith.constant 0 : index
    %c0_0 = arith.constant 0 : index
    %0 = vector.load %arg1[%c0, %c0_0] : memref<16x32xf32, #tpu.memory_space<vmem>>, vector<16x32xf32>
    %cst = arith.constant dense<0.000000e+00> : vector<16xf32>
    %1 = vector.multi_reduction <add>, %0, %cst [1] : vector<16x32xf32> to vector<16xf32>
    %2 = vector.shape_cast %1 : vector<16xf32> to vector<16x1xf32>
    %cst_1 = arith.constant 3.125000e-02 : f32
    %3 = vector.broadcast %cst_1 : f32 to vector<16x1xf32>
    %4 = arith.mulf %2, %3 : vector<16x1xf32>
    %5 = vector.broadcast %4 : vector<16x1xf32> to vector<16x32xf32>
    %6 = arith.subf %0, %5 : vector<16x32xf32>
    %7 = arith.mulf %6, %6 : vector<16x32xf32>
    %cst_2 = arith.constant dense<0.000000e+00> : vector<16xf32>
    %8 = vector.multi_reduction <add>, %7, %cst_2 [1] : vector<16x32xf32> to vector<16xf32>
    %9 = vector.shape_cast %8 : vector<16xf32> to vector<16x1xf32>
    %cst_3 = arith.constant 3.125000e-02 : f32
    %10 = vector.broadcast %cst_3 : f32 to vector<16x1xf32>
    %11 = arith.mulf %9, %10 : vector<16x1xf32>
    %cst_4 = arith.constant 9.99999974E-6 : f32
    %12 = vector.broadcast %cst_4 : f32 to vector<16x1xf32>
    %13 = arith.addf %11, %12 : vector<16x1xf32>
    %14 = math.rsqrt %13 : vector<16x1xf32>
    %15 = vector.broadcast %14 : vector<16x1xf32> to vector<16x32xf32>
    %16 = arith.mulf %6, %15 : vector<16x32xf32>
    %c0_5 = arith.constant 0 : index
    %c0_6 = arith.constant 0 : index
    %17 = vector.load %arg2[%c0_5, %c0_6] : memref<1x32xf32, #tpu.memory_space<vmem>>, vector<1x32xf32>
    %18 = vector.broadcast %17 : vector<1x32xf32> to vector<16x32xf32>
    %19 = arith.mulf %16, %18 : vector<16x32xf32>
    %c0_7 = arith.constant 0 : index
    %c0_8 = arith.constant 0 : index
    %20 = vector.load %arg3[%c0_7, %c0_8] : memref<1x32xf32, #tpu.memory_space<vmem>>, vector<1x32xf32>
    %21 = vector.broadcast %20 : vector<1x32xf32> to vector<16x32xf32>
    %22 = arith.addf %19, %21 : vector<16x32xf32>
    %23 = arith.truncf %22 : vector<16x32xf32> to vector<16x32xbf16>
    %c0_9 = arith.constant 0 : index
    %c0_10 = arith.constant 0 : index
    %24 = vector.load %arg4[%c0_9, %c0_10] : memref<32x128xbf16, #tpu.memory_space<vmem>>, vector<32x128xbf16>
    %cst_11 = arith.constant dense<0.000000e+00> : vector<16x128xf32>
    %25 = tpu.matmul %23, %24, %cst_11 {dimension_numbers = #tpu.dot_dimension_numbers<[1], [0], [0], [1], [0, 0, 1, 1], [], []>} : vector<16x32xbf16>, vector<32x128xbf16>, vector<16x128xf32> -> vector<16x128xf32>
    %c0_12 = arith.constant 0 : index
    %c0_13 = arith.constant 0 : index
    %26 = vector.load %arg5[%c0_12, %c0_13] : memref<1x128xf32, #tpu.memory_space<vmem>>, vector<1x128xf32>
    %27 = vector.broadcast %26 : vector<1x128xf32> to vector<16x128xf32>
    %28 = arith.addf %25, %27 : vector<16x128xf32>
    %cst_14 = arith.constant 0.000000e+00 : f32
    %29 = vector.broadcast %cst_14 : f32 to vector<16x128xf32>
    %30 = arith.maximumf %28, %29 : vector<16x128xf32>
    %31 = arith.truncf %30 : vector<16x128xf32> to vector<16x128xbf16>
    %c0_15 = arith.constant 0 : index
    %c0_16 = arith.constant 0 : index
    %32 = vector.load %arg6[%c0_15, %c0_16] : memref<128x32xbf16, #tpu.memory_space<vmem>>, vector<128x32xbf16>
    %cst_17 = arith.constant dense<0.000000e+00> : vector<16x32xf32>
    %33 = tpu.matmul %31, %32, %cst_17 {dimension_numbers = #tpu.dot_dimension_numbers<[1], [0], [0], [1], [0, 0, 1, 1], [], []>} : vector<16x128xbf16>, vector<128x32xbf16>, vector<16x32xf32> -> vector<16x32xf32>
    %c0_18 = arith.constant 0 : index
    %c0_19 = arith.constant 0 : index
    %34 = vector.load %arg7[%c0_18, %c0_19] : memref<1x32xf32, #tpu.memory_space<vmem>>, vector<1x32xf32>
    %35 = vector.broadcast %34 : vector<1x32xf32> to vector<16x32xf32>
    %36 = arith.addf %33, %35 : vector<16x32xf32>
    %c0_20 = arith.constant 0 : index
    %c0_21 = arith.constant 0 : index
    %37 = vector.load %arg1[%c0_20, %c0_21] : memref<16x32xf32, #tpu.memory_space<vmem>>, vector<16x32xf32>
    %38 = arith.addf %37, %36 : vector<16x32xf32>
    %c0_22 = arith.constant 0 : index
    %c0_23 = arith.constant 0 : index
    %39 = vector.load %arg8[%c0_22, %c0_23] : memref<16x32xf32, #tpu.memory_space<vmem>>, vector<16x32xf32>
    tpu.vector_store %arg8[%c0_22, %c0_23], %38 {strides = array<i32>} : memref<16x32xf32, #tpu.memory_space<vmem>>, vector<16x32xf32>,
    return
  }
  func.func @transform_0(%arg0: i32) -> (i32, i32) {
    %c0_i32 = arith.constant 0 : i32
    %c0_i32_0 = arith.constant 0 : i32
    return %arg0, %c0_i32 : i32, i32
  }
  func.func @transform_1(%arg0: i32) -> (i32, i32) {
    %c0_i32 = arith.constant 0 : i32
    %c0_i32_0 = arith.constant 0 : i32
    %c0_i32_1 = arith.constant 0 : i32
    return %c0_i32, %c0_i32_0 : i32, i32
  }
  func.func @transform_2(%arg0: i32) -> (i32, i32) {
    %c0_i32 = arith.constant 0 : i32
    %c0_i32_0 = arith.constant 0 : i32
    %c0_i32_1 = arith.constant 0 : i32
    return %c0_i32, %c0_i32_0 : i32, i32
  }
  func.func @transform_3(%arg0: i32) -> (i32, i32) {
    %c0_i32 = arith.constant 0 : i32
    %c0_i32_0 = arith.constant 0 : i32
    %c0_i32_1 = arith.constant 0 : i32
    return %c0_i32, %c0_i32_0 : i32, i32
  }
  func.func @transform_4(%arg0: i32) -> (i32, i32) {
    %c0_i32 = arith.constant 0 : i32
    %c0_i32_0 = arith.constant 0 : i32
    %c0_i32_1 = arith.constant 0 : i32
    return %c0_i32, %c0_i32_0 : i32, i32
  }
  func.func @transform_5(%arg0: i32) -> (i32, i32) {
    %c0_i32 = arith.constant 0 : i32
    %c0_i32_0 = arith.constant 0 : i32
    %c0_i32_1 = arith.constant 0 : i32
    return %c0_i32, %c0_i32_0 : i32, i32
  }
  func.func @transform_6(%arg0: i32) -> (i32, i32) {
    %c0_i32 = arith.constant 0 : i32
    %c0_i32_0 = arith.constant 0 : i32
    %c0_i32_1 = arith.constant 0 : i32
    return %c0_i32, %c0_i32_0 : i32, i32
  }
  func.func @transform_7(%arg0: i32) -> (i32, i32) {
    %c0_i32 = arith.constant 0 : i32
    %c0_i32_0 = arith.constant 0 : i32
    return %arg0, %c0_i32 : i32, i32
  }
}

module attributes {stable_mosaic.version = 11 : i64} {
  func.func @_mixer_kernel(%arg0: i32, %arg1: memref<16x32xf32, #tpu.memory_space<vmem>>, %arg2: memref<1x32xf32, #tpu.memory_space<vmem>>, %arg3: memref<1x32xf32, #tpu.memory_space<vmem>>, %arg4: memref<32x128xbf16, #tpu.memory_space<vmem>>, %arg5: memref<1x128xf32, #tpu.memory_space<vmem>>, %arg6: memref<128x32xbf16, #tpu.memory_space<vmem>>, %arg7: memref<1x32xf32, #tpu.memory_space<vmem>>, %arg8: memref<16x32xf32, #tpu.memory_space<vmem>>) attributes {dimension_semantics = [#tpu.dimension_semantics<parallel>], iteration_bounds = array<i64: 1>, scalar_prefetch = 0 : i64, scratch_operands = 0 : i64, tpu.core_type = #tpu.core_type<tc>, window_params = [{transform_indices = @transform_0, window_bounds = array<i64: 16, 32>}, {pipeline_mode = #tpu.pipeline_mode<synchronous>, transform_indices = @transform_1, window_bounds = array<i64: 1, 32>}, {pipeline_mode = #tpu.pipeline_mode<synchronous>, transform_indices = @transform_2, window_bounds = array<i64: 1, 32>}, {pipeline_mode = #tpu.pipeline_mode<synchronous>, transform_indices = @transform_3, window_bounds = array<i64: 32, 128>}, {pipeline_mode = #tpu.pipeline_mode<synchronous>, transform_indices = @transform_4, window_bounds = array<i64: 1, 128>}, {pipeline_mode = #tpu.pipeline_mode<synchronous>, transform_indices = @transform_5, window_bounds = array<i64: 128, 32>}, {pipeline_mode = #tpu.pipeline_mode<synchronous>, transform_indices = @transform_6, window_bounds = array<i64: 1, 32>}, {transform_indices = @transform_7, window_bounds = array<i64: 16, 32>}]} {
    %c0 = arith.constant 0 : index
    %c0_0 = arith.constant 0 : index
    %0 = vector.load %arg1[%c0, %c0_0] : memref<16x32xf32, #tpu.memory_space<vmem>>, vector<16x32xf32>
    %cst = arith.constant dense<0.000000e+00> : vector<16xf32>
    %1 = vector.multi_reduction <add>, %0, %cst [1] : vector<16x32xf32> to vector<16xf32>
    %2 = vector.shape_cast %1 : vector<16xf32> to vector<16x1xf32>
    %cst_1 = arith.constant 3.125000e-02 : f32
    %3 = vector.broadcast %cst_1 : f32 to vector<16x1xf32>
    %4 = arith.mulf %2, %3 : vector<16x1xf32>
    %5 = vector.broadcast %4 : vector<16x1xf32> to vector<16x32xf32>
    %6 = arith.subf %0, %5 : vector<16x32xf32>
    %7 = arith.mulf %6, %6 : vector<16x32xf32>
    %cst_2 = arith.constant dense<0.000000e+00> : vector<16xf32>
    %8 = vector.multi_reduction <add>, %7, %cst_2 [1] : vector<16x32xf32> to vector<16xf32>
    %9 = vector.shape_cast %8 : vector<16xf32> to vector<16x1xf32>
    %cst_3 = arith.constant 3.125000e-02 : f32
    %10 = vector.broadcast %cst_3 : f32 to vector<16x1xf32>
    %11 = arith.mulf %9, %10 : vector<16x1xf32>
    %cst_4 = arith.constant 9.99999974E-6 : f32
    %12 = vector.broadcast %cst_4 : f32 to vector<16x1xf32>
    %13 = arith.addf %11, %12 : vector<16x1xf32>
    %14 = math.rsqrt %13 : vector<16x1xf32>
    %15 = vector.broadcast %14 : vector<16x1xf32> to vector<16x32xf32>
    %16 = arith.mulf %6, %15 : vector<16x32xf32>
    %c0_5 = arith.constant 0 : index
    %c0_6 = arith.constant 0 : index
    %17 = vector.load %arg2[%c0_5, %c0_6] : memref<1x32xf32, #tpu.memory_space<vmem>>, vector<1x32xf32>
    %18 = vector.broadcast %17 : vector<1x32xf32> to vector<16x32xf32>
    %19 = arith.mulf %16, %18 : vector<16x32xf32>
    %c0_7 = arith.constant 0 : index
    %c0_8 = arith.constant 0 : index
    %20 = vector.load %arg3[%c0_7, %c0_8] : memref<1x32xf32, #tpu.memory_space<vmem>>, vector<1x32xf32>
    %21 = vector.broadcast %20 : vector<1x32xf32> to vector<16x32xf32>
    %22 = arith.addf %19, %21 : vector<16x32xf32>
    %23 = arith.truncf %22 : vector<16x32xf32> to vector<16x32xbf16>
    %c0_9 = arith.constant 0 : index
    %c0_10 = arith.constant 0 : index
    %24 = vector.load %arg4[%c0_9, %c0_10] : memref<32x128xbf16, #tpu.memory_space<vmem>>, vector<32x128xbf16>
    %cst_11 = arith.constant dense<0.000000e+00> : vector<16x128xf32>
    %25 = tpu.matmul %23, %24, %cst_11 {dimension_numbers = #tpu.dot_dimension_numbers<[1], [0], [0], [1], [0, 0, 1, 1], [], []>} : vector<16x32xbf16>, vector<32x128xbf16>, vector<16x128xf32> -> vector<16x128xf32>
    %c0_12 = arith.constant 0 : index
    %c0_13 = arith.constant 0 : index
    %26 = vector.load %arg5[%c0_12, %c0_13] : memref<1x128xf32, #tpu.memory_space<vmem>>, vector<1x128xf32>
    %27 = vector.broadcast %26 : vector<1x128xf32> to vector<16x128xf32>
    %28 = arith.addf %25, %27 : vector<16x128xf32>
    %cst_14 = arith.constant 0.000000e+00 : f32
    %29 = vector.broadcast %cst_14 : f32 to vector<16x128xf32>
    %30 = arith.maximumf %28, %29 : vector<16x128xf32>
    %31 = arith.truncf %30 : vector<16x128xf32> to vector<16x128xbf16>
    %c0_15 = arith.constant 0 : index
    %c0_16 = arith.constant 0 : index
    %32 = vector.load %arg6[%c0_15, %c0_16] : memref<128x32xbf16, #tpu.memory_space<vmem>>, vector<128x32xbf16>
    %cst_17 = arith.constant dense<0.000000e+00> : vector<16x32xf32>
    %33 = tpu.matmul %31, %32, %cst_17 {dimension_numbers = #tpu.dot_dimension_numbers<[1], [0], [0], [1], [0, 0, 1, 1], [], []>} : vector<16x128xbf16>, vector<128x32xbf16>, vector<16x32xf32> -> vector<16x32xf32>
    %c0_18 = arith.constant 0 : index
    %c0_19 = arith.constant 0 : index
    %34 = vector.load %arg7[%c0_18, %c0_19] : memref<1x32xf32, #tpu.memory_space<vmem>>, vector<1x32xf32>
    %35 = vector.broadcast %34 : vector<1x32xf32> to vector<16x32xf32>
    %36 = arith.addf %33, %35 : vector<16x32xf32>
    %c0_20 = arith.constant 0 : index
    %c0_21 = arith.constant 0 : index
    %37 = vector.load %arg1[%c0_20, %c0_21] : memref<16x32xf32, #tpu.memory_space<vmem>>, vector<16x32xf32>
    %38 = arith.addf %37, %36 : vector<16x32xf32>
    %c0_22 = arith.constant 0 : index
    %c0_23 = arith.constant 0 : index
    %39 = vector.load %arg8[%c0_22, %c0_23] : memref<16x32xf32, #tpu.memory_space<vmem>>, vector<16x32xf32>
    tpu.vector_store %arg8[%c0_22, %c0_23], %38 {strides = array<i32>} : memref<16x32xf32, #tpu.memory_space<vmem>>, vector<16x32xf32>,
    return
  }
  func.func @transform_0(%arg0: i32) -> (i32, i32) {
    %c0_i32 = arith.constant 0 : i32
    %c0_i32_0 = arith.constant 0 : i32
    return %arg0, %c0_i32 : i32, i32
  }
  func.func @transform_1(%arg0: i32) -> (i32, i32) {
    %c0_i32 = arith.constant 0 : i32
    %c0_i32_0 = arith.constant 0 : i32
    %c0_i32_1 = arith.constant 0 : i32
    return %c0_i32, %c0_i32_0 : i32, i32
  }
  func.func @transform_2(%arg0: i32) -> (i32, i32) {
    %c0_i32 = arith.constant 0 : i32
    %c0_i32_0 = arith.constant 0 : i32
    %c0_i32_1 = arith.constant 0 : i32
    return %c0_i32, %c0_i32_0 : i32, i32
  }
  func.func @transform_3(%arg0: i32) -> (i32, i32) {
    %c0_i32 = arith.constant 0 : i32
    %c0_i32_0 = arith.constant 0 : i32
    %c0_i32_1 = arith.constant 0 : i32
    return %c0_i32, %c0_i32_0 : i32, i32
  }
  func.func @transform_4(%arg0: i32) -> (i32, i32) {
    %c0_i32 = arith.constant 0 : i32
    %c0_i32_0 = arith.constant 0 : i32
    %c0_i32_1 = arith.constant 0 : i32
    return %c0_i32, %c0_i32_0 : i32, i32
  }
  func.func @transform_5(%arg0: i32) -> (i32, i32) {
    %c0_i32 = arith.constant 0 : i32
    %c0_i32_0 = arith.constant 0 : i32
    %c0_i32_1 = arith.constant 0 : i32
    return %c0_i32, %c0_i32_0 : i32, i32
  }
  func.func @transform_6(%arg0: i32) -> (i32, i32) {
    %c0_i32 = arith.constant 0 : i32
    %c0_i32_0 = arith.constant 0 : i32
    %c0_i32_1 = arith.constant 0 : i32
    return %c0_i32, %c0_i32_0 : i32, i32
  }
  func.func @transform_7(%arg0: i32) -> (i32, i32) {
    %c0_i32 = arith.constant 0 : i32
    %c0_i32_0 = arith.constant 0 : i32
    return %arg0, %c0_i32 : i32, i32
  }
}

</mosaic_0001>

<llo_original>
// kernel: tpu_custom_call.1
$region0: #{tpu_custom_call.1}
  #allocation0 [shape = 'u32[]', space=smem, size = 0x4, offset = 0x4, fixed_abs, tag = 'smem constant byte address 0x4 - core index']
  #allocation1 [shape = 'u32[72,128]{1,0:T(1,128)}', space=vmem, size = 0x9000, scoped, tag = 'internal scratch']
  %s0 = inlined_call_operand.vmem [shape: f32[16,32], index: 0, kind: input, shape index: {}]
  %s1 = inlined_call_operand.vmem [shape: f32[1,32], index: 1, kind: input, shape index: {}]
  %s2 = inlined_call_operand.vmem [shape: f32[1,32], index: 2, kind: input, shape index: {}]
  %s3 = inlined_call_operand.vmem [shape: bf16[32,128], index: 3, kind: input, shape index: {}]
  %s4 = inlined_call_operand.vmem [shape: f32[1,128], index: 4, kind: input, shape index: {}]
  %s5 = inlined_call_operand.vmem [shape: bf16[128,32], index: 5, kind: input, shape index: {}]
  %s6 = inlined_call_operand.vmem [shape: f32[1,32], index: 6, kind: input, shape index: {}]
  %s7 = inlined_call_operand.hbm [shape: f32[16,32], index: 7, kind: output, shape index: {}]
  %s8 = sld [smem:[#allocation0]]
  $region38: #{tpu_custom_call.1} parent=0
    _
  %s10 = ssub.s32 1, %s8
  %s11 = scalar_select 0, %s10, %s8
  $region1: #{tpu_custom_call.1} parent=0
    #allocation2 [shape = 'u8[8192]{0}', space=vmem, size = 0x2000, scoped, tag = 'output window, operand 0, single buffered']
    #allocation3 [shape = 's32[1]{0}', space=sflag, size = 0x4, scoped, tag = 'scoped memory for tpu_custom_call.1']
    %12 = vsyncpa [#allocation3], 0
    // Predicated region
    $region2: #{tpu_custom_call.1} parent=1 // pred_check
      _
    $region3: #{tpu_custom_call.1} parent=1 // pred_check_branch
      %14 = sbr.rel (0) target = $region5
    $region4: #{tpu_custom_call.1} parent=1 // pred_region
      _
    $region5: #{tpu_custom_call.1} parent=1 // pred_fallthru
      _
    // Predicated region
    $region6: #{tpu_custom_call.1} parent=1 // pred_check
      _
    $region7: #{tpu_custom_call.1} parent=1 // pred_check_branch
      %16 = sbr.rel (0) target = $region9
    $region8: #{tpu_custom_call.1} parent=1 // pred_region
      _
    $region9: #{tpu_custom_call.1} parent=1 // pred_fallthru
      _
    // Predicated region
    $region10: #{tpu_custom_call.1} parent=1 // pred_check
      _
    $region11: #{tpu_custom_call.1} parent=1 // pred_check_branch
      %18 = sbr.rel (0) target = $region13
    $region12: #{tpu_custom_call.1} parent=1 // pred_region
      _
    $region13: #{tpu_custom_call.1} parent=1 // pred_fallthru
      _
    // Predicated region
    $region14: #{tpu_custom_call.1} parent=1 // pred_check
      _
    $region15: #{tpu_custom_call.1} parent=1 // pred_check_branch
      %20 = sbr.rel (0) target = $region17
    $region16: #{tpu_custom_call.1} parent=1 // pred_region
      _
    $region17: #{tpu_custom_call.1} parent=1 // pred_fallthru
      _
    // Predicated region
    $region18: #{tpu_custom_call.1} parent=1 // pred_check
      _
    $region19: #{tpu_custom_call.1} parent=1 // pred_check_branch
      %22 = sbr.rel (0) target = $region21
    $region20: #{tpu_custom_call.1} parent=1 // pred_region
      _
    $region21: #{tpu_custom_call.1} parent=1 // pred_fallthru
      _
    // Predicated region
    $region22: #{tpu_custom_call.1} parent=1 // pred_check
      _
    $region23: #{tpu_custom_call.1} parent=1 // pred_check_branch
      %24 = sbr.rel (0) target = $region25
    $region24: #{tpu_custom_call.1} parent=1 // pred_region
      _
    $region25: #{tpu_custom_call.1} parent=1 // pred_fallthru
      _
    // Predicated region
    $region26: #{tpu_custom_call.1} parent=1 // pred_check
      _
    $region27: #{tpu_custom_call.1} parent=1 // pred_check_branch
      %26 = sbr.rel (0) target = $region29
    $region28: #{tpu_custom_call.1} parent=1 // pred_region
      _
    $region29: #{tpu_custom_call.1} parent=1 // pred_fallthru
      _
    %v28 = vld [vmem:[%s0] sm:$0xff]
    %v29 = vld [vmem:[%s0 + $0x8] sm:$0xff]
    %vm30 = vcmask 261120
    %v31 = vsel %vm30, %v28, 0.0
    %32 = vadd.xlane.f32.xlu0 %v31
    %v33 = vpop.xlane.xlu0 %32
    %v34 = vsel %vm30, %v29, 0.0
    %35 = vadd.xlane.f32.xlu0 %v34
    %v36 = vpop.xlane.xlu0 %35
    %v37 = vmul.f32 %v33, 0.03125
    %v38 = vmul.f32 %v36, 0.03125
    %v39 = vsub.f32 %v28, %v37
    %v40 = vsub.f32 %v29, %v38
    %v41 = vmul.f32 %v39, %v39
    %v42 = vmul.f32 %v40, %v40
    %v43 = vsel %vm30, %v41, 0.0
    %44 = vadd.xlane.f32.xlu0 %v43
    %v45 = vpop.xlane.xlu0 %44
    %v46 = vsel %vm30, %v42, 0.0
    %47 = vadd.xlane.f32.xlu0 %v46
    %v48 = vpop.xlane.xlu0 %47
    %v49 = vmul.f32 %v45, 0.03125
    %v50 = vmul.f32 %v48, 0.03125
    %v51 = vadd.f32 %v49, 1e-05
    %v52 = vadd.f32 %v50, 1e-05
    %v53 = vrsqrt.pop %v51
    %v54 = vmul.f32 %v53, %v51
    %v55 = vmul.f32 %v54, %v53
    %v56 = vmul.f32 0.5, %v55
    %v57 = vsub.f32 1.5, %v56
    %v58 = vmul.f32 %v53, %v57
    %vm59 = vweird.f32 %v51
    %vm60 = vweird.f32 %v53
    %vm61 = vmor %vm59, %vm60
    %v62 = vsel %vm61, %v53, %v58
    %v63 = vrsqrt.pop %v52
    %v64 = vmul.f32 %v63, %v52
    %v65 = vmul.f32 %v64, %v63
    %v66 = vmul.f32 0.5, %v65
    %v67 = vsub.f32 1.5, %v66
    %v68 = vmul.f32 %v63, %v67
    %vm69 = vweird.f32 %v52
    %vm70 = vweird.f32 %v63
    %vm71 = vmor %vm69, %vm70
    %v72 = vsel %vm71, %v63, %v68
    %v73 = vmul.f32 %v39, %v62
    %v74 = vmul.f32 %v40, %v72
    %v75 = vld [vmem:[%s1] sm:$0x1]
    %v77 = vperm.slane %v75, 0
    %v79 = vmul.f32 %v73, %v77
    %v80 = vmul.f32 %v74, %v77
    %v81 = vld [vmem:[%s2] sm:$0x1]
    %v83 = vperm.slane %v81, 0
    %v85 = vadd.f32 %v79, %v83
    %v86 = vadd.f32 %v80, %v83
    %v87 = vpack.c.bf16 %v86, %v85
    %v88 = vld [vmem:[%s3] sm:$0xf]
    %v89 = vld [vmem:[%s3 + $0x4] sm:$0xf]
    %v90 = vld [vmem:[%s3 + $0x8] sm:$0xf]
    %v91 = vld [vmem:[%s3 + $0xc] sm:$0xf]
    %v92 = vld [vmem:[%s4] sm:$0x1]
    %v94 = vperm.slane %v92, 0
    %v100 = vunpack.c.l.b16 %v88
    %v101 = vunpack.c.l.b16 %v89
    %v102 = vunpack.c.l.b16 %v90
    %v103 = vunpack.c.l.b16 %v91
    %v104 = vpack.c.b16 %v101, %v100
    %v105 = vpack.c.b16 %v103, %v102
    %v109 = vsel %vm30, %v87, 0
    %111 = vmatpush.bf16.msra.mxu0 0
    %112 = vmatpush.bf16.msra.mxu0 0
    %113 = vmatpush.bf16.msra.mxu0 0
    %114 = vmatpush.bf16.msra.mxu0 0
    %115 = vmatpush.bf16.msra.mxu0 0
    %116 = vmatpush.bf16.msra.mxu0 0
    %117 = vmatpush.bf16.msra.mxu0 %v105
    %118 = vmatpush.bf16.msra.mxu0 %v104
    %119 = vmatmul.bf16.gmra.mxu0 %v109
    %v120 = vpop.f32.mrf.mxu0
    %v121 = vadd.f32 %v94, %v120
    %v122 = vpop.f32.mrf.mxu0
    %v123 = vadd.f32 %v94, %v122
    %124 = vdwg.mxu0
    %v125 = vmax.f32 %v121, 0.0
    %v126 = vmax.f32 %v123, 0.0
    %v127 = vpack.c.bf16 %v126, %v125
    %v128 = vld [vmem:[%s5] sm:$0xf]
    %v129 = vld [vmem:[%s5 + $0x4] sm:$0xf]
    %v130 = vld [vmem:[%s5 + $0x8] sm:$0xf]
    %v131 = vld [vmem:[%s5 + $0xc] sm:$0xf]
    %v132 = vld [vmem:[%s5 + $0x10] sm:$0xf]
    %v133 = vld [vmem:[%s5 + $0x14] sm:$0xf]
    %v134 = vld [vmem:[%s5 + $0x18] sm:$0xf]
    %v135 = vld [vmem:[%s5 + $0x1c] sm:$0xf]
    %v136 = vld [vmem:[%s5 + $0x20] sm:$0xf]
    %v137 = vld [vmem:[%s5 + $0x24] sm:$0xf]
    %v138 = vld [vmem:[%s5 + $0x28] sm:$0xf]
    %v139 = vld [vmem:[%s5 + $0x2c] sm:$0xf]
    %v140 = vld [vmem:[%s5 + $0x30] sm:$0xf]
    %v141 = vld [vmem:[%s5 + $0x34] sm:$0xf]
    %v142 = vld [vmem:[%s5 + $0x38] sm:$0xf]
    %v143 = vld [vmem:[%s5 + $0x3c] sm:$0xf]
    %v144 = vld [vmem:[%s6] sm:$0x1]
    %v146 = vperm.slane %v144, 0
    %v164 = vunpack.c.l.b16 %v128
    %v165 = vunpack.c.l.b16 %v129
    %v166 = vunpack.c.l.b16 %v130
    %v167 = vunpack.c.l.b16 %v131
    %v168 = vunpack.c.l.b16 %v132
    %v169 = vunpack.c.l.b16 %v133
    %v170 = vunpack.c.l.b16 %v134
    %v171 = vunpack.c.l.b16 %v135
    %v172 = vunpack.c.l.b16 %v136
    %v173 = vunpack.c.l.b16 %v137
    %v174 = vunpack.c.l.b16 %v138
    %v175 = vunpack.c.l.b16 %v139
    %v176 = vunpack.c.l.b16 %v140
    %v177 = vunpack.c.l.b16 %v141
    %v178 = vunpack.c.l.b16 %v142
    %v179 = vunpack.c.l.b16 %v143
    %v180 = vpack.c.b16 %v165, %v164
    %v181 = vpack.c.b16 %v167, %v166
    %v182 = vpack.c.b16 %v169, %v168
    %v183 = vpack.c.b16 %v171, %v170
    %v184 = vpack.c.b16 %v173, %v172
    %v185 = vpack.c.b16 %v175, %v174
    %v186 = vpack.c.b16 %v177, %v176
    %v187 = vpack.c.b16 %v179, %v178
    %196 = vmatpush.bf16.msra.mxu0 %v187
    %197 = vmatpush.bf16.msra.mxu0 %v186
    %198 = vmatpush.bf16.msra.mxu0 %v185
    %199 = vmatpush.bf16.msra.mxu0 %v184
    %200 = vmatpush.bf16.msra.mxu0 %v183
    %201 = vmatpush.bf16.msra.mxu0 %v182
    %202 = vmatpush.bf16.msra.mxu0 %v181
    %203 = vmatpush.bf16.msra.mxu0 %v180
    %204 = vmatmul.bf16.gmra.mxu0 %v127
    %v205 = vpop.f32.mrf.mxu0
    %v206 = vadd.f32 %v146, %v205
    %v207 = vpop.f32.mrf.mxu0
    %v208 = vadd.f32 %v146, %v207
    %209 = vdwg.mxu0
    %v210 = vadd.f32 %v28, %v206
    %v211 = vadd.f32 %v29, %v208
    %212 = vst.msk [vmem:[#allocation2] sm:$0xff] %vm30, %v210
    %213 = vst.msk [vmem:[#allocation2 + $0x8] sm:$0xff] %vm30, %v211
    // Predicated region
    $region30: #{tpu_custom_call.1} parent=1 // pred_check
      _
    $region31: #{tpu_custom_call.1} parent=1 // pred_check_branch
      %215 = sbr.rel (0) target = $region33
    $region32: #{tpu_custom_call.1} parent=1 // pred_region
      %217 = vsyncadd [#allocation3], 0
      %s218 = sshll.u32 [#allocation2], 4
      %s219 = int_to_ptr.vmem [resolvable:$true] %s218
      %s220 = sshll.u32 %s7, 4
      %s221 = int_to_ptr.hbm [resolvable:$true] %s220
      %226 = dma.vmem_to_hbm [thread:$0]  %s219, 256, %s221, [#allocation3], 128, 128, 8
    $region33: #{tpu_custom_call.1} parent=1 // pred_fallthru
      _
    // Predicated region
    $region34: #{tpu_custom_call.1} parent=1 // pred_check
      _
    $region35: #{tpu_custom_call.1} parent=1 // pred_check_branch
      %228 = sbr.rel (0) target = $region37
    $region36: #{tpu_custom_call.1} parent=1 // pred_region
      %230 = dma.done [#allocation3], 256
    $region37: #{tpu_custom_call.1} parent=1 // pred_fallthru
      _
    %231 = vsyncpa [#allocation3], 1

// kernel: tpu_custom_call.1
$region0: #{tpu_custom_call.1}
  #allocation0 [shape = 'u32[]', space=smem, size = 0x4, offset = 0x4, fixed_abs, tag = 'smem constant byte address 0x4 - core index']
  #allocation1 [shape = 'u32[72,128]{1,0:T(1,128)}', space=vmem, size = 0x9000, scoped, tag = 'internal scratch']
  %s0 = inlined_call_operand.vmem [shape: f32[16,32], index: 0, kind: input, shape index: {}]
  %s1 = inlined_call_operand.vmem [shape: f32[1,32], index: 1, kind: input, shape index: {}]
  %s2 = inlined_call_operand.vmem [shape: f32[1,32], index: 2, kind: input, shape index: {}]
  %s3 = inlined_call_operand.vmem [shape: bf16[32,128], index: 3, kind: input, shape index: {}]
  %s4 = inlined_call_operand.vmem [shape: f32[1,128], index: 4, kind: input, shape index: {}]
  %s5 = inlined_call_operand.vmem [shape: bf16[128,32], index: 5, kind: input, shape index: {}]
  %s6 = inlined_call_operand.vmem [shape: f32[1,32], index: 6, kind: input, shape index: {}]
  %s7 = inlined_call_operand.hbm [shape: f32[16,32], index: 7, kind: output, shape index: {}]
  %s8 = sld [smem:[#allocation0]]
  $region38: #{tpu_custom_call.1} parent=0
    _
  %s10 = ssub.s32 1, %s8
  %s11 = scalar_select 0, %s10, %s8
  $region1: #{tpu_custom_call.1} parent=0
    #allocation2 [shape = 'u8[8192]{0}', space=vmem, size = 0x2000, scoped, tag = 'output window, operand 0, single buffered']
    #allocation3 [shape = 's32[1]{0}', space=sflag, size = 0x4, scoped, tag = 'scoped memory for tpu_custom_call.1']
    %12 = vsyncpa [#allocation3], 0
    // Predicated region
    $region2: #{tpu_custom_call.1} parent=1 // pred_check
      _
    $region3: #{tpu_custom_call.1} parent=1 // pred_check_branch
      %14 = sbr.rel (0) target = $region5
    $region4: #{tpu_custom_call.1} parent=1 // pred_region
      _
    $region5: #{tpu_custom_call.1} parent=1 // pred_fallthru
      _
    // Predicated region
    $region6: #{tpu_custom_call.1} parent=1 // pred_check
      _
    $region7: #{tpu_custom_call.1} parent=1 // pred_check_branch
      %16 = sbr.rel (0) target = $region9
    $region8: #{tpu_custom_call.1} parent=1 // pred_region
      _
    $region9: #{tpu_custom_call.1} parent=1 // pred_fallthru
      _
    // Predicated region
    $region10: #{tpu_custom_call.1} parent=1 // pred_check
      _
    $region11: #{tpu_custom_call.1} parent=1 // pred_check_branch
      %18 = sbr.rel (0) target = $region13
    $region12: #{tpu_custom_call.1} parent=1 // pred_region
      _
    $region13: #{tpu_custom_call.1} parent=1 // pred_fallthru
      _
    // Predicated region
    $region14: #{tpu_custom_call.1} parent=1 // pred_check
      _
    $region15: #{tpu_custom_call.1} parent=1 // pred_check_branch
      %20 = sbr.rel (0) target = $region17
    $region16: #{tpu_custom_call.1} parent=1 // pred_region
      _
    $region17: #{tpu_custom_call.1} parent=1 // pred_fallthru
      _
    // Predicated region
    $region18: #{tpu_custom_call.1} parent=1 // pred_check
      _
    $region19: #{tpu_custom_call.1} parent=1 // pred_check_branch
      %22 = sbr.rel (0) target = $region21
    $region20: #{tpu_custom_call.1} parent=1 // pred_region
      _
    $region21: #{tpu_custom_call.1} parent=1 // pred_fallthru
      _
    // Predicated region
    $region22: #{tpu_custom_call.1} parent=1 // pred_check
      _
    $region23: #{tpu_custom_call.1} parent=1 // pred_check_branch
      %24 = sbr.rel (0) target = $region25
    $region24: #{tpu_custom_call.1} parent=1 // pred_region
      _
    $region25: #{tpu_custom_call.1} parent=1 // pred_fallthru
      _
    // Predicated region
    $region26: #{tpu_custom_call.1} parent=1 // pred_check
      _
    $region27: #{tpu_custom_call.1} parent=1 // pred_check_branch
      %26 = sbr.rel (0) target = $region29
    $region28: #{tpu_custom_call.1} parent=1 // pred_region
      _
    $region29: #{tpu_custom_call.1} parent=1 // pred_fallthru
      _
    %v28 = vld [vmem:[%s0] sm:$0xff]
    %v29 = vld [vmem:[%s0 + $0x8] sm:$0xff]
    %vm30 = vcmask 261120
    %v31 = vsel %vm30, %v28, 0.0
    %32 = vadd.xlane.f32.xlu0 %v31
    %v33 = vpop.xlane.xlu0 %32
    %v34 = vsel %vm30, %v29, 0.0
    %35 = vadd.xlane.f32.xlu0 %v34
    %v36 = vpop.xlane.xlu0 %35
    %v37 = vmul.f32 %v33, 0.03125
    %v38 = vmul.f32 %v36, 0.03125
    %v39 = vsub.f32 %v28, %v37
    %v40 = vsub.f32 %v29, %v38
    %v41 = vmul.f32 %v39, %v39
    %v42 = vmul.f32 %v40, %v40
    %v43 = vsel %vm30, %v41, 0.0
    %44 = vadd.xlane.f32.xlu0 %v43
    %v45 = vpop.xlane.xlu0 %44
    %v46 = vsel %vm30, %v42, 0.0
    %47 = vadd.xlane.f32.xlu0 %v46
    %v48 = vpop.xlane.xlu0 %47
    %v49 = vmul.f32 %v45, 0.03125
    %v50 = vmul.f32 %v48, 0.03125
    %v51 = vadd.f32 %v49, 1e-05
    %v52 = vadd.f32 %v50, 1e-05
    %v53 = vrsqrt.pop %v51
    %v54 = vmul.f32 %v53, %v51
    %v55 = vmul.f32 %v54, %v53
    %v56 = vmul.f32 0.5, %v55
    %v57 = vsub.f32 1.5, %v56
    %v58 = vmul.f32 %v53, %v57
    %vm59 = vweird.f32 %v51
    %vm60 = vweird.f32 %v53
    %vm61 = vmor %vm59, %vm60
    %v62 = vsel %vm61, %v53, %v58
    %v63 = vrsqrt.pop %v52
    %v64 = vmul.f32 %v63, %v52
    %v65 = vmul.f32 %v64, %v63
    %v66 = vmul.f32 0.5, %v65
    %v67 = vsub.f32 1.5, %v66
    %v68 = vmul.f32 %v63, %v67
    %vm69 = vweird.f32 %v52
    %vm70 = vweird.f32 %v63
    %vm71 = vmor %vm69, %vm70
    %v72 = vsel %vm71, %v63, %v68
    %v73 = vmul.f32 %v39, %v62
    %v74 = vmul.f32 %v40, %v72
    %v75 = vld [vmem:[%s1] sm:$0x1]
    %v77 = vperm.slane %v75, 0
    %v79 = vmul.f32 %v73, %v77
    %v80 = vmul.f32 %v74, %v77
    %v81 = vld [vmem:[%s2] sm:$0x1]
    %v83 = vperm.slane %v81, 0
    %v85 = vadd.f32 %v79, %v83
    %v86 = vadd.f32 %v80, %v83
    %v87 = vpack.c.bf16 %v86, %v85
    %v88 = vld [vmem:[%s3] sm:$0xf]
    %v89 = vld [vmem:[%s3 + $0x4] sm:$0xf]
    %v90 = vld [vmem:[%s3 + $0x8] sm:$0xf]
    %v91 = vld [vmem:[%s3 + $0xc] sm:$0xf]
    %v92 = vld [vmem:[%s4] sm:$0x1]
    %v94 = vperm.slane %v92, 0
    %v100 = vunpack.c.l.b16 %v88
    %v101 = vunpack.c.l.b16 %v89
    %v102 = vunpack.c.l.b16 %v90
    %v103 = vunpack.c.l.b16 %v91
    %v104 = vpack.c.b16 %v101, %v100
    %v105 = vpack.c.b16 %v103, %v102
    %v109 = vsel %vm30, %v87, 0
    %111 = vmatpush.bf16.msra.mxu0 0
    %112 = vmatpush.bf16.msra.mxu0 0
    %113 = vmatpush.bf16.msra.mxu0 0
    %114 = vmatpush.bf16.msra.mxu0 0
    %115 = vmatpush.bf16.msra.mxu0 0
    %116 = vmatpush.bf16.msra.mxu0 0
    %117 = vmatpush.bf16.msra.mxu0 %v105
    %118 = vmatpush.bf16.msra.mxu0 %v104
    %119 = vmatmul.bf16.gmra.mxu0 %v109
    %v120 = vpop.f32.mrf.mxu0
    %v121 = vadd.f32 %v94, %v120
    %v122 = vpop.f32.mrf.mxu0
    %v123 = vadd.f32 %v94, %v122
    %124 = vdwg.mxu0
    %v125 = vmax.f32 %v121, 0.0
    %v126 = vmax.f32 %v123, 0.0
    %v127 = vpack.c.bf16 %v126, %v125
    %v128 = vld [vmem:[%s5] sm:$0xf]
    %v129 = vld [vmem:[%s5 + $0x4] sm:$0xf]
    %v130 = vld [vmem:[%s5 + $0x8] sm:$0xf]
    %v131 = vld [vmem:[%s5 + $0xc] sm:$0xf]
    %v132 = vld [vmem:[%s5 + $0x10] sm:$0xf]
    %v133 = vld [vmem:[%s5 + $0x14] sm:$0xf]
    %v134 = vld [vmem:[%s5 + $0x18] sm:$0xf]
    %v135 = vld [vmem:[%s5 + $0x1c] sm:$0xf]
    %v136 = vld [vmem:[%s5 + $0x20] sm:$0xf]
    %v137 = vld [vmem:[%s5 + $0x24] sm:$0xf]
    %v138 = vld [vmem:[%s5 + $0x28] sm:$0xf]
    %v139 = vld [vmem:[%s5 + $0x2c] sm:$0xf]
    %v140 = vld [vmem:[%s5 + $0x30] sm:$0xf]
    %v141 = vld [vmem:[%s5 + $0x34] sm:$0xf]
    %v142 = vld [vmem:[%s5 + $0x38] sm:$0xf]
    %v143 = vld [vmem:[%s5 + $0x3c] sm:$0xf]
    %v144 = vld [vmem:[%s6] sm:$0x1]
    %v146 = vperm.slane %v144, 0
    %v164 = vunpack.c.l.b16 %v128
    %v165 = vunpack.c.l.b16 %v129
    %v166 = vunpack.c.l.b16 %v130
    %v167 = vunpack.c.l.b16 %v131
    %v168 = vunpack.c.l.b16 %v132
    %v169 = vunpack.c.l.b16 %v133
    %v170 = vunpack.c.l.b16 %v134
    %v171 = vunpack.c.l.b16 %v135
    %v172 = vunpack.c.l.b16 %v136
    %v173 = vunpack.c.l.b16 %v137
    %v174 = vunpack.c.l.b16 %v138
    %v175 = vunpack.c.l.b16 %v139
    %v176 = vunpack.c.l.b16 %v140
    %v177 = vunpack.c.l.b16 %v141
    %v178 = vunpack.c.l.b16 %v142
    %v179 = vunpack.c.l.b16 %v143
    %v180 = vpack.c.b16 %v165, %v164
    %v181 = vpack.c.b16 %v167, %v166
    %v182 = vpack.c.b16 %v169, %v168
    %v183 = vpack.c.b16 %v171, %v170
    %v184 = vpack.c.b16 %v173, %v172
    %v185 = vpack.c.b16 %v175, %v174
    %v186 = vpack.c.b16 %v177, %v176
    %v187 = vpack.c.b16 %v179, %v178
    %196 = vmatpush.bf16.msra.mxu0 %v187
    %197 = vmatpush.bf16.msra.mxu0 %v186
    %198 = vmatpush.bf16.msra.mxu0 %v185
    %199 = vmatpush.bf16.msra.mxu0 %v184
    %200 = vmatpush.bf16.msra.mxu0 %v183
    %201 = vmatpush.bf16.msra.mxu0 %v182
    %202 = vmatpush.bf16.msra.mxu0 %v181
    %203 = vmatpush.bf16.msra.mxu0 %v180
    %204 = vmatmul.bf16.gmra.mxu0 %v127
    %v205 = vpop.f32.mrf.mxu0
    %v206 = vadd.f32 %v146, %v205
    %v207 = vpop.f32.mrf.mxu0
    %v208 = vadd.f32 %v146, %v207
    %209 = vdwg.mxu0
    %v210 = vadd.f32 %v28, %v206
    %v211 = vadd.f32 %v29, %v208
    %212 = vst.msk [vmem:[#allocation2] sm:$0xff] %vm30, %v210
    %213 = vst.msk [vmem:[#allocation2 + $0x8] sm:$0xff] %vm30, %v211
    // Predicated region
    $region30: #{tpu_custom_call.1} parent=1 // pred_check
      _
    $region31: #{tpu_custom_call.1} parent=1 // pred_check_branch
      %215 = sbr.rel (0) target = $region33
    $region32: #{tpu_custom_call.1} parent=1 // pred_region
      %217 = vsyncadd [#allocation3], 0
      %s218 = sshll.u32 [#allocation2], 4
      %s219 = int_to_ptr.vmem [resolvable:$true] %s218
      %s220 = sshll.u32 %s7, 4
      %s221 = int_to_ptr.hbm [resolvable:$true] %s220
      %226 = dma.vmem_to_hbm [thread:$0]  %s219, 256, %s221, [#allocation3], 128, 128, 8
    $region33: #{tpu_custom_call.1} parent=1 // pred_fallthru
      _
    // Predicated region
    $region34: #{tpu_custom_call.1} parent=1 // pred_check
      _
    $region35: #{tpu_custom_call.1} parent=1 // pred_check_branch
      %228 = sbr.rel (0) target = $region37
    $region36: #{tpu_custom_call.1} parent=1 // pred_region
      %230 = dma.done [#allocation3], 256
    $region37: #{tpu_custom_call.1} parent=1 // pred_fallthru
      _
    %231 = vsyncpa [#allocation3], 1

</llo_original>
